<compile_context>
chip_gen: v6e
topology: v6e:2x2x1
jax: 0.10.0
libtpu: 0.0.40
codegen_flags: <defaults>
</compile_context>

<pallas_src>
import functools

import jax
import jax.numpy as jnp
from jax.experimental import pallas as pl
from jax.experimental.pallas import tpu as pltpu


def _dice_ce_partials_kernel(logits_ref, target_ref, ce_ref, inter_ref, card_ref, *,
                             n_total, apply_softmax):
    n_idx = pl.program_id(0)

    x = logits_ref[...].astype(jnp.float32)            # (B, C, TN)  cast per-tile in VMEM
    t = target_ref[...]                                 # (B, TN)     int32
    B, C, TN = x.shape

    needs_mask = (n_total % TN) != 0                    # static (trace-time) bool

    if needs_mask:
        col = n_idx * TN + jax.lax.broadcasted_iota(jnp.int32, (1, 1, TN), 2)
        valid = col < n_total                           # (1, 1, TN) bool

    # --- softmax pieces along the class (sublane) axis -------------------------------
    m = jnp.max(x, axis=1, keepdims=True)               # (B, 1, TN)
    xm = x - m
    ex = jnp.exp(xm)                                    # EUP
    s = jnp.sum(ex, axis=1, keepdims=True)              # (B, 1, TN)
    log_s = jnp.log(s)                                  # EUP, only 1/C of elements

    # --- boolean one-hot mask (no f32 one-hot materialized) --------------------------
    cls = jax.lax.broadcasted_iota(jnp.int32, (B, C, TN), 1)
    mask = cls == t[:, None, :]                         # (B, C, TN) bool
    if needs_mask:
        mask = mask & valid

    # --- cross-entropy partial --------------------------------------------------------
    # -sum(onehot * logp) = sum(log s) - sum(where(mask, x - m))   (sum_C onehot == 1)
    if needs_mask:
        ce_a = jnp.sum(jnp.where(valid, log_s, 0.0), axis=(0, 1, 2), keepdims=True)
    else:
        ce_a = jnp.sum(log_s, axis=(0, 1, 2), keepdims=True)
    ce_b = jnp.sum(jnp.where(mask, xm, 0.0), axis=(0, 1, 2), keepdims=True)
    ce_ref[...] = ce_a - ce_b                           # (1, 1, 1)

    # --- dice partials -----------------------------------------------------------------
    probs = ex * pl.reciprocal(s) if apply_softmax else x
    if needs_mask:
        probs = jnp.where(valid, probs, 0.0)            # zero padded lanes (kills NaN/garbage)

    inter = jnp.sum(jnp.where(mask, probs, 0.0), axis=2)        # (B, C)
    count = jnp.sum(jnp.where(mask, 1.0, 0.0), axis=2)          # (B, C)
    psum = jnp.sum(probs, axis=2)                               # (B, C)
    inter_ref[...] = inter[None, :, :]                           # (1, B, C)
    card_ref[...] = (count + psum)[None, :, :]                   # (1, B, C)


def _round_up(x, m):
    return ((x + m - 1) // m) * m


def _pick_tile(B, C, N, itemsize):
    # Per lane-column bytes: double-buffered input tiles + ~6 live f32 full-size
    # temporaries the body keeps.  Budget is conservative so it fits the scoped VMEM of
    # v5e/v6e/v7x with headroom.
    per_col = B * C * (2 * itemsize + 6 * 4) + B * (2 * 4)
    budget = 16 * 1024 * 1024
    tn = budget // max(per_col, 1)
    tn = max(128, min(8192, (tn // 128) * 128))
    return tn


def dice_ce_loss(logits_nchw, target_nhw, *, ignore_first=True, apply_softmax=True,
                 eps=1.0, tn=None, vmem_limit_bytes=48 * 1024 * 1024):
    """Pallas TPU implementation of Dice_CELoss.forward (returns a scalar f32)."""
    B, C, H, W = logits_nchw.shape
    N = H * W
    logits = logits_nchw.reshape(B, C, N)               # keep caller dtype; cast in-kernel
    target = target_nhw.reshape(B, N).astype(jnp.int32)

    if tn is None:
        tn = _pick_tile(B, C, N, logits.dtype.itemsize)
    else:
        tn = max(128, (int(tn) // 128) * 128)
    tn = min(tn, _round_up(N, 128))

    nt = (N + tn - 1) // tn

    kernel = functools.partial(
        _dice_ce_partials_kernel, n_total=N, apply_softmax=apply_softmax)

    ce_p, inter_p, card_p = pl.pallas_call(
        kernel,
        out_shape=(
            jax.ShapeDtypeStruct((nt, 1, 1), jnp.float32),
            jax.ShapeDtypeStruct((nt, B, C), jnp.float32),
            jax.ShapeDtypeStruct((nt, B, C), jnp.float32),
        ),
        grid=(nt,),
        in_specs=[
            pl.BlockSpec((B, C, tn), lambda n: (0, 0, n)),
            pl.BlockSpec((B, tn), lambda n: (0, n)),
        ],
        out_specs=(
            pl.BlockSpec((1, 1, 1), lambda n: (n, 0, 0)),
            pl.BlockSpec((1, B, C), lambda n: (n, 0, 0)),
            pl.BlockSpec((1, B, C), lambda n: (n, 0, 0)),
        ),
        compiler_params=pltpu.CompilerParams(
            dimension_semantics=("parallel",),
            vmem_limit_bytes=vmem_limit_bytes,
        ),
    )(logits, target)

    # Tiny O(nt*B*C) epilogue in XLA.
    ce = jnp.sum(ce_p) / jnp.float32(B * N)
    inter = jnp.sum(inter_p, axis=0)                     # (B, C)
    card = jnp.sum(card_p, axis=0)                       # (B, C)
    c0 = 1 if ignore_first else 0
    n_cls = C - c0
    inter = inter[:, c0:]
    card = card[:, c0:]
    dice = (2.0 * inter + eps) / (card + eps)
    dice_mean = jnp.mean(jnp.sum(dice, axis=1) / jnp.float32(n_cls))
    return 0.8 * ce - 0.2 * jnp.log(dice_mean)


def _reference_loss(logits_nchw, target_nhw, *, ignore_first=True, apply_softmax=True, eps=1.0):
    """Pure-JAX mirror of the PyTorch forward, for validation."""
    B, C, H, W = logits_nchw.shape
    x = logits_nchw.astype(jnp.float32)
    t = target_nhw.astype(jnp.int32)

    logp = jax.nn.log_softmax(x, axis=1)                              # (B,C,H,W)
    onehot = jax.nn.one_hot(t, C, dtype=jnp.float32)                  # (B,H,W,C)
    onehot = jnp.transpose(onehot, (0, 3, 1, 2))                      # (B,C,H,W)
    ce = -jnp.mean(jnp.sum(onehot * logp, axis=1))

    probs = jax.nn.softmax(x, axis=1) if apply_softmax else x
    if ignore_first:
        probs = probs[:, 1:]
        onehot = onehot[:, 1:]
    inter = jnp.sum(onehot * probs, axis=(2, 3))
    card = jnp.sum(onehot + probs, axis=(2, 3))
    dice = (2.0 * inter + eps) / (card + eps)
    dice = jnp.mean(jnp.sum(dice, axis=1) / probs.shape[1])
    return 0.8 * ce - 0.2 * jnp.log(dice)


if __name__ == "__main__":
    key = jax.random.PRNGKey(0)
    k1, k2, k3, k4 = jax.random.split(key, 4)

    # Case 1: small, tile-aligned; tn=128 -> 2 grid steps, exercises per-tile partials.
    B, C, H, W = 2, 4, 16, 16
    logits = jax.random.normal(k1, (B, C, H, W), dtype=jnp.float32)
    target = jax.random.randint(k2, (B, H, W), 0, C, dtype=jnp.int32)
    loss = jax.block_until_ready(dice_ce_loss(logits, target, tn=128))
    ref = jax.block_until_ready(_reference_loss(logits, target))
    assert jnp.allclose(loss, ref, rtol=1e-5, atol=1e-5), (loss, ref)

    # Case 2: bf16 logits + ragged N (255) -> boundary tile masked in-kernel.
    B2, C2, H2, W2 = 2, 4, 15, 17
    logits2 = jax.random.normal(k3, (B2, C2, H2, W2), dtype=jnp.bfloat16)
    target2 = jax.random.randint(k4, (B2, H2, W2), 0, C2, dtype=jnp.int32)
    loss2 = jax.block_until_ready(dice_ce_loss(logits2, target2, tn=128))
    ref2 = jax.block_until_ready(_reference_loss(logits2, target2))
    assert jnp.allclose(loss2, ref2, rtol=1e-4, atol=1e-4), (loss2, ref2)

    print("KERNEL_OK")
</pallas_src>

<mosaic_0001>
module attributes {stable_mosaic.version = 11 : i64} {
  func.func @_dice_ce_partials_kernel(%arg0: i32, %arg1: memref<2x4x128xf32, #tpu.memory_space<vmem>>, %arg2: memref<2x128xi32, #tpu.memory_space<vmem>>, %arg3: memref<1x1x1xf32, #tpu.memory_space<vmem>>, %arg4: memref<1x2x4xf32, #tpu.memory_space<vmem>>, %arg5: memref<1x2x4xf32, #tpu.memory_space<vmem>>) attributes {dimension_semantics = [#tpu.dimension_semantics<parallel>], iteration_bounds = array<i64: 2>, scalar_prefetch = 0 : i64, scratch_operands = 0 : i64, tpu.core_type = #tpu.core_type<tc>, window_params = [{transform_indices = @transform_0, window_bounds = array<i64: 2, 4, 128>}, {transform_indices = @transform_1, window_bounds = array<i64: 2, 128>}, {transform_indices = @transform_2, window_bounds = array<i64: 1, 1, 1>}, {transform_indices = @transform_3, window_bounds = array<i64: 1, 2, 4>}, {transform_indices = @transform_4, window_bounds = array<i64: 1, 2, 4>}]} {
    %c0 = arith.constant 0 : index
    %c0_0 = arith.constant 0 : index
    %c0_1 = arith.constant 0 : index
    %0 = vector.load %arg1[%c0, %c0_0, %c0_1] : memref<2x4x128xf32, #tpu.memory_space<vmem>>, vector<2x4x128xf32>
    %c0_2 = arith.constant 0 : index
    %c0_3 = arith.constant 0 : index
    %1 = vector.load %arg2[%c0_2, %c0_3] : memref<2x128xi32, #tpu.memory_space<vmem>>, vector<2x128xi32>
    %cst = arith.constant dense<0xFF800000> : vector<2x128xf32>
    %2 = vector.multi_reduction <maximumf>, %0, %cst [1] : vector<2x4x128xf32> to vector<2x128xf32>
    %3 = vector.shape_cast %2 : vector<2x128xf32> to vector<2x1x128xf32>
    %4 = vector.broadcast %3 : vector<2x1x128xf32> to vector<2x4x128xf32>
    %5 = arith.subf %0, %4 : vector<2x4x128xf32>
    %6 = math.exp %5 : vector<2x4x128xf32>
    %cst_4 = arith.constant dense<0.000000e+00> : vector<2x128xf32>
    %7 = vector.multi_reduction <add>, %6, %cst_4 [1] : vector<2x4x128xf32> to vector<2x128xf32>
    %8 = vector.shape_cast %7 : vector<2x128xf32> to vector<2x1x128xf32>
    %9 = math.log %8 : vector<2x1x128xf32>
    %10 = tpu.iota {dimensions = array<i32: 1>} : vector<2x4x128xi32>
    %11 = vector.shape_cast %1 : vector<2x128xi32> to vector<2x1x128xi32>
    %12 = vector.broadcast %11 : vector<2x1x128xi32> to vector<2x4x128xi32>
    %13 = arith.cmpi eq, %10, %12 : vector<2x4x128xi32>
    %14 = vector.shape_cast %9 : vector<2x1x128xf32> to vector<1x2x1x128xf32>
    %cst_5 = arith.constant dense<0.000000e+00> : vector<1xf32>
    %15 = vector.multi_reduction <add>, %14, %cst_5 [1, 2, 3] : vector<1x2x1x128xf32> to vector<1xf32>
    %16 = vector.shape_cast %15 : vector<1xf32> to vector<1x1x1x1xf32>
    %17 = vector.extract %16[0, 0, 0, 0] : f32 from vector<1x1x1x1xf32>
    %18 = vector.broadcast %17 : f32 to vector<1x1x1xf32>
    %cst_6 = arith.constant 0.000000e+00 : f32
    %19 = vector.broadcast %cst_6 : f32 to vector<2x4x128xf32>
    %20 = arith.select %13, %5, %19 : vector<2x4x128xi1>, vector<2x4x128xf32>
    %21 = vector.shape_cast %20 : vector<2x4x128xf32> to vector<1x2x4x128xf32>
    %cst_7 = arith.constant dense<0.000000e+00> : vector<1xf32>
    %22 = vector.multi_reduction <add>, %21, %cst_7 [1, 2, 3] : vector<1x2x4x128xf32> to vector<1xf32>
    %23 = vector.shape_cast %22 : vector<1xf32> to vector<1x1x1x1xf32>
    %24 = vector.extract %23[0, 0, 0, 0] : f32 from vector<1x1x1x1xf32>
    %25 = vector.broadcast %24 : f32 to vector<1x1x1xf32>
    %26 = arith.subf %18, %25 : vector<1x1x1xf32>
    %c0_8 = arith.constant 0 : index
    %c0_9 = arith.constant 0 : index
    %c0_10 = arith.constant 0 : index
    %27 = vector.load %arg3[%c0_8, %c0_9, %c0_10] : memref<1x1x1xf32, #tpu.memory_space<vmem>>, vector<1x1x1xf32>
    tpu.vector_store %arg3[%c0_8, %c0_9, %c0_10], %26 {strides = array<i32>} : memref<1x1x1xf32, #tpu.memory_space<vmem>>, vector<1x1x1xf32>,
    %28 = tpu.reciprocal %8 : vector<2x1x128xf32> -> vector<2x1x128xf32>
    %29 = vector.broadcast %28 : vector<2x1x128xf32> to vector<2x4x128xf32>
    %30 = arith.mulf %6, %29 : vector<2x4x128xf32>
    %cst_11 = arith.constant 0.000000e+00 : f32
    %31 = vector.broadcast %cst_11 : f32 to vector<2x4x128xf32>
    %32 = arith.select %13, %30, %31 : vector<2x4x128xi1>, vector<2x4x128xf32>
    %cst_12 = arith.constant dense<0.000000e+00> : vector<2x4xf32>
    %33 = vector.multi_reduction <add>, %32, %cst_12 [2] : vector<2x4x128xf32> to vector<2x4xf32>
    %cst_13 = arith.constant 1.000000e+00 : f32
    %cst_14 = arith.constant 0.000000e+00 : f32
    %34 = vector.broadcast %cst_13 : f32 to vector<2x4x128xf32>
    %35 = vector.broadcast %cst_14 : f32 to vector<2x4x128xf32>
    %36 = arith.select %13, %34, %35 : vector<2x4x128xi1>, vector<2x4x128xf32>
    %cst_15 = arith.constant dense<0.000000e+00> : vector<2x4xf32>
    %37 = vector.multi_reduction <add>, %36, %cst_15 [2] : vector<2x4x128xf32> to vector<2x4xf32>
    %cst_16 = arith.constant dense<0.000000e+00> : vector<2x4xf32>
    %38 = vector.multi_reduction <add>, %30, %cst_16 [2] : vector<2x4x128xf32> to vector<2x4xf32>
    %39 = vector.shape_cast %33 : vector<2x4xf32> to vector<1x2x4xf32>
    %c0_17 = arith.constant 0 : index
    %c0_18 = arith.constant 0 : index
    %c0_19 = arith.constant 0 : index
    %40 = vector.load %arg4[%c0_17, %c0_18, %c0_19] : memref<1x2x4xf32, #tpu.memory_space<vmem>>, vector<1x2x4xf32>
    tpu.vector_store %arg4[%c0_17, %c0_18, %c0_19], %39 {strides = array<i32>} : memref<1x2x4xf32, #tpu.memory_space<vmem>>, vector<1x2x4xf32>,
    %41 = arith.addf %37, %38 : vector<2x4xf32>
    %42 = vector.shape_cast %41 : vector<2x4xf32> to vector<1x2x4xf32>
    %c0_20 = arith.constant 0 : index
    %c0_21 = arith.constant 0 : index
    %c0_22 = arith.constant 0 : index
    %43 = vector.load %arg5[%c0_20, %c0_21, %c0_22] : memref<1x2x4xf32, #tpu.memory_space<vmem>>, vector<1x2x4xf32>
    tpu.vector_store %arg5[%c0_20, %c0_21, %c0_22], %42 {strides = array<i32>} : memref<1x2x4xf32, #tpu.memory_space<vmem>>, vector<1x2x4xf32>,
    return
  }
  func.func @transform_0(%arg0: i32) -> (i32, i32, i32) {
    %c0_i32 = arith.constant 0 : i32
    %c0_i32_0 = arith.constant 0 : i32
    %c0_i32_1 = arith.constant 0 : i32
    return %c0_i32, %c0_i32_0, %arg0 : i32, i32, i32
  }
  func.func @transform_1(%arg0: i32) -> (i32, i32) {
    %c0_i32 = arith.constant 0 : i32
    %c0_i32_0 = arith.constant 0 : i32
    return %c0_i32, %arg0 : i32, i32
  }
  func.func @transform_2(%arg0: i32) -> (i32, i32, i32) {
    %c0_i32 = arith.constant 0 : i32
    %c0_i32_0 = arith.constant 0 : i32
    %c0_i32_1 = arith.constant 0 : i32
    return %arg0, %c0_i32, %c0_i32_0 : i32, i32, i32
  }
  func.func @transform_3(%arg0: i32) -> (i32, i32, i32) {
    %c0_i32 = arith.constant 0 : i32
    %c0_i32_0 = arith.constant 0 : i32
    %c0_i32_1 = arith.constant 0 : i32
    return %arg0, %c0_i32, %c0_i32_0 : i32, i32, i32
  }
  func.func @transform_4(%arg0: i32) -> (i32, i32, i32) {
    %c0_i32 = arith.constant 0 : i32
    %c0_i32_0 = arith.constant 0 : i32
    %c0_i32_1 = arith.constant 0 : i32
    return %arg0, %c0_i32, %c0_i32_0 : i32, i32, i32
  }
}

</mosaic_0001>

<llo_original>
// kernel: tpu_custom_call.1
$region0: #{tpu_custom_call.1}
  #allocation0 [shape = 'u32[]', space=smem, size = 0x4, offset = 0x4, fixed_abs, tag = 'smem constant byte address 0x4 - core index']
  #allocation1 [shape = 'u32[144,128]{1,0:T(1,128)}', space=vmem, size = 0x12000, scoped, tag = 'internal scratch']
  %s0 = inlined_call_operand.hbm [shape: f32[2,4,256], index: 0, kind: input, shape index: {}]
  %s1 = inlined_call_operand.hbm [shape: s32[2,256], index: 1, kind: input, shape index: {}]
  %s2 = inlined_call_operand.vmem [shape: f32[2,1,1], index: 2, kind: output, shape index: {0}]
  %s3 = inlined_call_operand.hbm [shape: f32[2,2,4], index: 3, kind: output, shape index: {1}]
  %s4 = inlined_call_operand.hbm [shape: f32[2,2,4], index: 4, kind: output, shape index: {2}]
  %5 = xla_tuple %s2, %s3, %s4
  %s6 = sld [smem:[#allocation0]]
  $region65: #{tpu_custom_call.1} parent=0
    _
  %s8 = ssub.s32 1, %s6
  %s9 = scalar_select 0, %s8, %s6
  $region1: #{tpu_custom_call.1} parent=0
    #allocation2 [shape = 'u8[8192]{0}', space=vmem, size = 0x2000, scoped, tag = 'input window, operand 0']
    #allocation3 [shape = 's32[2]{0}', space=sflag, size = 0x8, scoped, tag = 'scoped memory for tpu_custom_call.1']
    #allocation4 [shape = 's32[2]{0}', space=sflag, size = 0x8, scoped, tag = 'scoped memory for tpu_custom_call.1']
    #allocation5 [shape = 'u8[2048]{0}', space=vmem, size = 0x800, scoped, tag = 'input window, operand 1']
    #allocation6 [shape = 's32[2]{0}', space=sflag, size = 0x8, scoped, tag = 'scoped memory for tpu_custom_call.1']
    #allocation7 [shape = 'u8[2048]{0}', space=vmem, size = 0x800, scoped, tag = 'output window, operand 1']
    #allocation8 [shape = 'u8[2048]{0}', space=vmem, size = 0x800, scoped, tag = 'output window, operand 2']
    #allocation9 [shape = 's32[2]{0}', space=sflag, size = 0x8, scoped, tag = 'scoped memory for tpu_custom_call.1']
    %10 = vsyncpa [#allocation3], 0
    %s11 = scalar_lea.sflag [#allocation3], 1
    %12 = vsyncpa %s11, 0
    %13 = vsyncpa [#allocation6], 0
    %s14 = scalar_lea.sflag [#allocation6], 1
    %15 = vsyncpa %s14, 0
    %16 = vsyncpa [#allocation4], 0
    %s17 = scalar_lea.sflag [#allocation4], 1
    %18 = vsyncpa %s17, 0
    %19 = vsyncpa [#allocation9], 0
    %s20 = scalar_lea.sflag [#allocation9], 1
    %21 = vsyncpa %s20, 0
    loop: start=0, step=1, limit=4
    $region2: #{tpu_custom_call.1} parent=1 // loop_pre_header
      _
    $region3: #{tpu_custom_call.1} parent=1 // loop_header
      %s23 = sphi 0, %s27
      %p24 = scmp.ge.s32.totalorder %s23, 4
      %s33 = sphi 0, %s35
      %s36 = sphi 0, %s33
      %s37 = sphi 0, %s36
      %s53 = sphi 0, %s37
      %s59 = sphi 0, %s61
      %s62 = sphi 0, %s59
      %s63 = sphi 0, %s62
      %s79 = sphi 0, %s63
      %s85 = sphi 0, %s87
      %s88 = sphi 0, %s85
      %s89 = sphi 0, %s88
      %s105 = sphi 0, %s89
      %s111 = sphi 0, %s113
      %s114 = sphi 0, %s111
      %s115 = sphi 0, %s114
      %s131 = sphi 0, %s115
      %s137 = sphi 0, %s139
      %s140 = sphi 0, %s137
      %s141 = sphi 0, %s140
      %s157 = sphi 0, %s141
    $region4: #{tpu_custom_call.1} parent=1 // loop_header_branch
      %26 = sbr.rel (%p24) target = $region8
    $region5: #{tpu_custom_call.1} parent=1 // loop_body
      %s28 = ssub.s32 %s23, 1
      %s29 = ssub.s32 %s23, 2
      %s30 = sadd.s32 %s23, 1
      %s31 = ssub.s32 %s23, %s30
      %p32 = scmp.eq.s32.totalorder %s31, 0
      %s34 = sadd.s32 %s33, 1
      %s35 = scalar_select %p32, %s33, %s34
      %p38 = pneg %p32
      %p39 = scmp.eq.s32.totalorder %s23, 1
      %p40 = por %p38, %p39
      %p41 = scmp.ne.s32.totalorder %s33, %s36
      %p42 = scmp.eq.s32.totalorder %s23, 0
      %p43 = por %p41, %p42
      %p44 = scmp.ne.s32.totalorder %s33, %s36
      %p45 = scmp.eq.s32.totalorder %s28, 1
      %p46 = por %p44, %p45
      %p47 = scmp.ne.s32.totalorder %s36, %s37
      %p48 = scmp.eq.s32.totalorder %s28, 0
      %p49 = por %p47, %p48
      %p50 = scmp.ne.s32.totalorder %s36, %s37
      %p51 = scmp.eq.s32.totalorder %s29, 1
      %p52 = por %p50, %p51
      %p54 = scmp.ne.s32.totalorder %s37, %s53
      %p55 = scmp.eq.s32.totalorder %s29, 0
      %p56 = por %p54, %p55
      %s57 = ssub.s32 %s23, %s30
      %p58 = scmp.eq.s32.totalorder %s57, 0
      %s60 = sadd.s32 %s59, 1
      %s61 = scalar_select %p58, %s59, %s60
      %p64 = pneg %p58
      %p65 = scmp.eq.s32.totalorder %s23, 1
      %p66 = por %p64, %p65
      %p67 = scmp.ne.s32.totalorder %s59, %s62
      %p68 = scmp.eq.s32.totalorder %s23, 0
      %p69 = por %p67, %p68
      %p70 = scmp.ne.s32.totalorder %s59, %s62
      %p71 = scmp.eq.s32.totalorder %s28, 1
      %p72 = por %p70, %p71
      %p73 = scmp.ne.s32.totalorder %s62, %s63
      %p74 = scmp.eq.s32.totalorder %s28, 0
      %p75 = por %p73, %p74
      %p76 = scmp.ne.s32.totalorder %s62, %s63
      %p77 = scmp.eq.s32.totalorder %s29, 1
      %p78 = por %p76, %p77
      %p80 = scmp.ne.s32.totalorder %s63, %s79
      %p81 = scmp.eq.s32.totalorder %s29, 0
      %p82 = por %p80, %p81
      %s83 = ssub.s32 %s23, %s30
      %p84 = scmp.eq.s32.totalorder %s83, 0
      %s86 = sadd.s32 %s85, 1
      %s87 = scalar_select %p84, %s85, %s86
      %p90 = pneg %p84
      %p91 = scmp.eq.s32.totalorder %s23, 1
      %p92 = por %p90, %p91
      %p93 = scmp.ne.s32.totalorder %s85, %s88
      %p94 = scmp.eq.s32.totalorder %s23, 0
      %p95 = por %p93, %p94
      %p96 = scmp.ne.s32.totalorder %s85, %s88
      %p97 = scmp.eq.s32.totalorder %s28, 1
      %p98 = por %p96, %p97
      %p99 = scmp.ne.s32.totalorder %s88, %s89
      %p100 = scmp.eq.s32.totalorder %s28, 0
      %p101 = por %p99, %p100
      %p102 = scmp.ne.s32.totalorder %s88, %s89
      %p103 = scmp.eq.s32.totalorder %s29, 1
      %p104 = por %p102, %p103
      %p106 = scmp.ne.s32.totalorder %s89, %s105
      %p107 = scmp.eq.s32.totalorder %s29, 0
      %p108 = por %p106, %p107
      %s109 = ssub.s32 %s23, %s30
      %p110 = scmp.eq.s32.totalorder %s109, 0
      %s112 = sadd.s32 %s111, 1
      %s113 = scalar_select %p110, %s111, %s112
      %p116 = pneg %p110
      %p117 = scmp.eq.s32.totalorder %s23, 1
      %p118 = por %p116, %p117
      %p119 = scmp.ne.s32.totalorder %s111, %s114
      %p120 = scmp.eq.s32.totalorder %s23, 0
      %p121 = por %p119, %p120
      %p122 = scmp.ne.s32.totalorder %s111, %s114
      %p123 = scmp.eq.s32.totalorder %s28, 1
      %p124 = por %p122, %p123
      %p125 = scmp.ne.s32.totalorder %s114, %s115
      %p126 = scmp.eq.s32.totalorder %s28, 0
      %p127 = por %p125, %p126
      %p128 = scmp.ne.s32.totalorder %s114, %s115
      %p129 = scmp.eq.s32.totalorder %s29, 1
      %p130 = por %p128, %p129
      %p132 = scmp.ne.s32.totalorder %s115, %s131
      %p133 = scmp.eq.s32.totalorder %s29, 0
      %p134 = por %p132, %p133
      %s135 = ssub.s32 %s23, %s30
      %p136 = scmp.eq.s32.totalorder %s135, 0
      %s138 = sadd.s32 %s137, 1
      %s139 = scalar_select %p136, %s137, %s138
      %p142 = pneg %p136
      %p143 = scmp.eq.s32.totalorder %s23, 1
      %p144 = por %p142, %p143
      %p145 = scmp.ne.s32.totalorder %s137, %s140
      %p146 = scmp.eq.s32.totalorder %s23, 0
      %p147 = por %p145, %p146
      %p148 = scmp.ne.s32.totalorder %s137, %s140
      %p149 = scmp.eq.s32.totalorder %s28, 1
      %p150 = por %p148, %p149
      %p151 = scmp.ne.s32.totalorder %s140, %s141
      %p152 = scmp.eq.s32.totalorder %s28, 0
      %p153 = por %p151, %p152
      %p154 = scmp.ne.s32.totalorder %s140, %s141
      %p155 = scmp.eq.s32.totalorder %s29, 1
      %p156 = por %p154, %p155
      %p158 = scmp.ne.s32.totalorder %s141, %s157
      %p159 = scmp.eq.s32.totalorder %s29, 0
      %p160 = por %p158, %p159
      %p161 = scmp.le.s32.totalorder 1, %s23
      %p162 = scmp.lt.s32.totalorder %s23, 3
      %p163 = pnand %p161, %p162
      %p164 = pneg %p163
      // Predicated region
      $region9: #{tpu_custom_call.1} parent=5 // pred_check
        _
      $region10: #{tpu_custom_call.1} parent=5 // pred_check_branch
        %166 = sbr.rel (%p163) target = $region12
      $region11: #{tpu_custom_call.1} parent=5 // pred_region
        %s167 = ssub.s32 %s23, 1
      $region12: #{tpu_custom_call.1} parent=5 // pred_fallthru
        _
      %p168 = scmp.lt.s32.totalorder %s23, 2
      // Predicated region
      $region13: #{tpu_custom_call.1} parent=5 // pred_check
        %p169 = pneg %p168
      $region14: #{tpu_custom_call.1} parent=5 // pred_check_branch
        %171 = sbr.rel (%p169) target = $region16
      $region15: #{tpu_custom_call.1} parent=5 // pred_region
        // Predicated region
        $region17: #{tpu_custom_call.1} parent=15 // pred_check
          %p172 = pneg %p43
        $region18: #{tpu_custom_call.1} parent=15 // pred_check_branch
          %174 = sbr.rel (%p172) target = $region20
        $region19: #{tpu_custom_call.1} parent=15 // pred_region
          %s175 = sand.u32 %s33, 1
          %s176 = scalar_lea.sflag [#allocation3], %s175
          %s177 = sand.u32 %s33, 1
          %s178 = smul.addr %s177, 8
          %s179 = scalar_lea.vmem [#allocation2], %s178
          %s181 = ssub.s32 128, 128
          %182 = vsyncadd %s176, %s181
          %s183 = smul.addr %s23, 64
          %s184 = scalar_lea.hbm %s0, %s183
          %s185 = sshll.u32 %s179, 4
          %s186 = int_to_ptr.vmem [resolvable:$true] %s185
          %191 = dma.hbm_to_vmem [thread:$0]  %s184, 128, %s186, %s176, 128, 64, 4
        $region20: #{tpu_custom_call.1} parent=15 // pred_fallthru
          _
        // Predicated region
        $region21: #{tpu_custom_call.1} parent=15 // pred_check
          %p192 = pneg %p69
        $region22: #{tpu_custom_call.1} parent=15 // pred_check_branch
          %194 = sbr.rel (%p192) target = $region24
        $region23: #{tpu_custom_call.1} parent=15 // pred_region
          %s195 = sand.u32 %s59, 1
          %s196 = scalar_lea.sflag [#allocation6], %s195
          %s197 = sand.u32 %s59, 1
          %s198 = smul.addr %s197, 2
          %s199 = scalar_lea.vmem [#allocation5], %s198
          %s201 = ssub.s32 32, 32
          %202 = vsyncadd %s196, %s201
          %s203 = smul.addr %s23, 32
          %s204 = scalar_lea.hbm %s1, %s203
          %s206 = sshll.u32 %s199, 4
          %s207 = int_to_ptr.vmem [resolvable:$true] %s206
          %209 = dma.hbm_to_vmem [thread:$0]  %s204, 32, %s207, %s196
        $region24: #{tpu_custom_call.1} parent=15 // pred_fallthru
          _
      $region16: #{tpu_custom_call.1} parent=5 // pred_fallthru
        _
      %p210 = scmp.le.s32.totalorder 1, %s23
      %p211 = scmp.lt.s32.totalorder %s23, 3
      %p212 = pnand %p210, %p211
      %p213 = pneg %p212
      // Predicated region
      $region25: #{tpu_custom_call.1} parent=5 // pred_check
        _
      $region26: #{tpu_custom_call.1} parent=5 // pred_check_branch
        %215 = sbr.rel (%p212) target = $region28
      $region27: #{tpu_custom_call.1} parent=5 // pred_region
        %s216 = ssub.s32 %s23, 1
        %s217 = sand.u32 %s36, 1
        %s218 = scalar_lea.sflag [#allocation3], %s217
        %s219 = sand.u32 %s36, 1
        %s220 = smul.addr %s219, 8
        %s221 = scalar_lea.vmem [#allocation2], %s220
        // Predicated region
        $region29: #{tpu_custom_call.1} parent=27 // pred_check
          %p222 = pneg %p49
        $region30: #{tpu_custom_call.1} parent=27 // pred_check_branch
          %224 = sbr.rel (%p222) target = $region32
        $region31: #{tpu_custom_call.1} parent=27 // pred_region
          %225 = dma.done %s218, 128
        $region32: #{tpu_custom_call.1} parent=27 // pred_fallthru
          _
        %s226 = sand.u32 %s62, 1
        %s227 = scalar_lea.sflag [#allocation6], %s226
        %s228 = sand.u32 %s62, 1
        %s229 = smul.addr %s228, 2
        %s230 = scalar_lea.vmem [#allocation5], %s229
        // Predicated region
        $region33: #{tpu_custom_call.1} parent=27 // pred_check
          %p231 = pneg %p75
        $region34: #{tpu_custom_call.1} parent=27 // pred_check_branch
          %233 = sbr.rel (%p231) target = $region36
        $region35: #{tpu_custom_call.1} parent=27 // pred_region
          %234 = dma.done %s227, 32
        $region36: #{tpu_custom_call.1} parent=27 // pred_fallthru
          _
        %s235 = sand.u32 %s36, 1
        %s236 = scalar_lea.sflag [#allocation3], %s235
        %s237 = sand.u32 %s36, 1
        %s238 = smul.addr %s237, 8
        %s239 = scalar_lea.vmem [#allocation2], %s238
        %p240 = pneg %p49
        %p241 = pneg %p46
        %s242 = sand.u32 %s62, 1
        %s243 = scalar_lea.sflag [#allocation6], %s242
        %s244 = sand.u32 %s62, 1
        %s245 = smul.addr %s244, 2
        %s246 = scalar_lea.vmem [#allocation5], %s245
        %p247 = pneg %p75
        %p248 = pneg %p72
        %p249 = pneg %p101
        %p250 = pneg %p98
        %p251 = scmp.lt.s32.totalorder %s28, 1
        %s252 = scalar_select %p251, %s28, 1
        %s253 = scalar_lea.vmem %s2, %s252
        %p254 = pneg %p127
        %p255 = pneg %p124
        %s256 = sand.u32 %s114, 1
        %s257 = scalar_lea.sflag [#allocation4], %s256
        %s258 = sand.u32 %s114, 1
        %s259 = smul.addr %s258, 2
        %s260 = scalar_lea.vmem [#allocation7], %s259
        %p261 = pneg %p153
        %p262 = pneg %p150
        %s263 = sand.u32 %s140, 1
        %s264 = scalar_lea.sflag [#allocation9], %s263
        %s265 = sand.u32 %s140, 1
        %s266 = smul.addr %s265, 2
        %s267 = scalar_lea.vmem [#allocation8], %s266
        %p268 = scmp.lt.s32.totalorder %s28, 1
        %s269 = scalar_select %p268, %s28, 1
        %s270 = scalar_lea.vmem %s2, %s269
        %v271 = vld [vmem:[%s221] sm:$0xf]
        %v272 = vld [vmem:[%s221 + $0x4] sm:$0xf]
        %v273 = vld [vmem:[%s230] sm:$0x3]
        %vm274 = vcmask 1043456
        %v275 = vsel %vm274, %v271, -inf
        %v276 = vrot.slane %v275, 4
        %v277 = vmax.f32 %v275, %v276
        %v278 = vrot.slane %v277, 2
        %v279 = vmax.f32 %v277, %v278
        %v280 = vrot.slane %v279, 1
        %v281 = vmax.f32 %v279, %v280
        %v282 = vsel %vm274, %v272, -inf
        %v283 = vrot.slane %v282, 4
        %v284 = vmax.f32 %v282, %v283
        %v285 = vrot.slane %v284, 2
        %v286 = vmax.f32 %v284, %v285
        %v287 = vrot.slane %v286, 1
        %v288 = vmax.f32 %v286, %v287
        %v289 = vsub.f32 %v271, %v281
        %v290 = vsub.f32 %v272, %v288
        %v291 = vmul.f32 %v289, 1.442695
        %v292 = vpow.pop %v291
        %v293 = vmul.f32 %v290, 1.442695
        %v294 = vpow.pop %v293
        %v295 = vsel %vm274, %v292, 0.0
        %v296 = vrot.slane %v295, 4
        %v297 = vadd.f32 %v295, %v296
        %v298 = vrot.slane %v297, 2
        %v299 = vadd.f32 %v297, %v298
        %v300 = vrot.slane %v299, 1
        %v301 = vadd.f32 %v299, %v300
        %v302 = vsel %vm274, %v294, 0.0
        %v303 = vrot.slane %v302, 4
        %v304 = vadd.f32 %v302, %v303
        %v305 = vrot.slane %v304, 2
        %v306 = vadd.f32 %v304, %v305
        %v307 = vrot.slane %v306, 1
        %v308 = vadd.f32 %v306, %v307
        %v309 = vlog2.pop %v301
        %v310 = vmul.f32 %v309, 0.6931472
        %v311 = vlog2.pop %v308
        %v312 = vmul.f32 %v311, 0.6931472
        %v313 = vlaneseq
        %v314 = vshrl.u32 %v313, 7
        %v316 = vunpack.c.l.s4 1966171168
        %v317 = vunpack.c.0.s8 %v316
        %v318 = vlaneseq
        %v319 = vshrl.u32 %v318, 7
        %v320 = vsub.s32 %v317, %v319
        %v321 = vrot.slane %v273, %v320
        %v322 = vcombine.high %v321, %v321
        %v324 = vunpack.c.l.s4 1966171168
        %v325 = vunpack.c.0.s8 %v324
        %v326 = vlaneseq
        %v327 = vshrl.u32 %v326, 7
        %v328 = vsub.s32 %v325, %v327
        %v329 = vrot.slane %v321, %v328
        %v331 = vunpack.c.l.s4 1966171168
        %v332 = vunpack.c.0.s8 %v331
        %v333 = vlaneseq
        %v334 = vshrl.u32 %v333, 7
        %v335 = vsub.s32 %v332, %v334
        %v336 = vrot.slane %v322, %v335
        %v337 = vlaneseq
        %v338 = vshrl.u32 %v337, 7
        %v339 = vsub.s32 0, %v338
        %v340 = vrot.slane %v329, %v339
        %v341 = vlaneseq
        %v342 = vshrl.u32 %v341, 7
        %v343 = vsub.s32 0, %v342
        %v344 = vrot.slane %v336, %v343
        %vm345 = vcmp.eq.s32.totalorder %v314, %v340
        %vm346 = vcmp.eq.s32.totalorder %v314, %v344
        %vm347 = vcmask 1040384
        %v348 = vsel %vm347, %v310, 0.0
        %v349 = vsel %vm347, %v312, 0.0
        %v350 = vadd.f32 %v348, %v349
        %351 = vadd.xlane.f32.xlu0 %v350
        %v352 = vpop.xlane.xlu0 %351
        %v353 = vrot.slane %v352, 4
        %v354 = vadd.f32 %v352, %v353
        %v355 = vrot.slane %v354, 2
        %v356 = vadd.f32 %v354, %v355
        %v357 = vrot.slane %v356, 1
        %v358 = vadd.f32 %v356, %v357
        %s359 = vtos %v358
        %v360 = vstv %s359
        %v361 = vsel %vm345, %v289, 0.0
        %v362 = vsel %vm346, %v290, 0.0
        %v363 = vsel %vm274, %v361, 0.0
        %v364 = vsel %vm274, %v362, 0.0
        %v365 = vadd.f32 %v363, %v364
        %366 = vadd.xlane.f32.xlu0 %v365
        %v367 = vpop.xlane.xlu0 %366
        %v368 = vrot.slane %v367, 4
        %v369 = vadd.f32 %v367, %v368
        %v370 = vrot.slane %v369, 2
        %v371 = vadd.f32 %v369, %v370
        %v372 = vrot.slane %v371, 1
        %v373 = vadd.f32 %v371, %v372
        %s374 = vtos %v373
        %v375 = vstv %s374
        %v376 = vsub.f32 %v360, %v375
        %vm377 = vcmask 0
        %378 = vst.msk [vmem:[%s270] sm:$0x1] %vm377, %v376
        %v379 = vrcp.pop %v301
        %v380 = vrcp.pop %v308
        %v381 = vmul.f32 %v292, %v379
        %v382 = vmul.f32 %v294, %v380
        %v383 = vsel %vm345, %v381, 0.0
        %v384 = vsel %vm346, %v382, 0.0
        %v385 = vsel %vm274, %v383, 0.0
        %386 = vadd.xlane.f32.xlu0 %v385
        %v387 = vpop.xlane.xlu0 %386
        %v388 = vsel %vm274, %v384, 0.0
        %389 = vadd.xlane.f32.xlu0 %v388
        %v390 = vpop.xlane.xlu0 %389
        %v391 = vsel %vm345, 1.0, 0.0
        %v392 = vsel %vm346, 1.0, 0.0
        %v393 = vsel %vm274, %v391, 0.0
        %394 = vadd.xlane.f32.xlu0 %v393
        %v395 = vpop.xlane.xlu0 %394
        %v396 = vsel %vm274, %v392, 0.0
        %397 = vadd.xlane.f32.xlu0 %v396
        %v398 = vpop.xlane.xlu0 %397
        %v399 = vsel %vm274, %v381, 0.0
        %400 = vadd.xlane.f32.xlu0 %v399
        %v401 = vpop.xlane.xlu0 %400
        %v402 = vsel %vm274, %v382, 0.0
        %403 = vadd.xlane.f32.xlu0 %v402
        %v404 = vpop.xlane.xlu0 %403
        %v407 = vlaneseq
        %v408 = vand.u32 %v407, 127
        %v409 = vlaneseq
        %v410 = vshrl.u32 %v409, 7
        %v411 = vsub.s32 %v408, %v410
        %v412 = vrot.slane %v387, %v411
        %v413 = vlaneseq
        %v414 = vshrl.u32 %v413, 7
        %v415 = vsub.s32 %v408, %v414
        %v416 = vrot.slane %v390, %v415
        %vm417 = vcmask 1041409
        %v418 = vsel %vm417, %v416, %v412
        %vm420 = vcmask 25600
        %421 = vst.msk [vmem:[%s260] sm:$0x3] %vm420, %v418
        %v422 = vadd.f32 %v395, %v401
        %v423 = vadd.f32 %v398, %v404
        %v426 = vlaneseq
        %v427 = vshrl.u32 %v426, 7
        %v428 = vsub.s32 %v408, %v427
        %v429 = vrot.slane %v422, %v428
        %v430 = vlaneseq
        %v431 = vshrl.u32 %v430, 7
        %v432 = vsub.s32 %v408, %v431
        %v433 = vrot.slane %v423, %v432
        %v434 = vsel %vm417, %v433, %v429
        %436 = vst.msk [vmem:[%s267] sm:$0x3] %vm420, %v434
        %p437 = scmp.lt.s32.totalorder %s28, 1
        %s438 = scalar_select %p437, %s28, 1
        %s439 = scalar_lea.vmem %s2, %s438
        %s440 = sand.u32 %s114, 1
        %s441 = scalar_lea.sflag [#allocation4], %s440
        %s442 = sand.u32 %s114, 1
        %s443 = smul.addr %s442, 2
        %s444 = scalar_lea.vmem [#allocation7], %s443
        %s445 = sand.u32 %s140, 1
        %s446 = scalar_lea.sflag [#allocation9], %s445
        %s447 = sand.u32 %s140, 1
        %s448 = smul.addr %s447, 2
        %s449 = scalar_lea.vmem [#allocation8], %s448
        // Predicated region
        $region37: #{tpu_custom_call.1} parent=27 // pred_check
          %p450 = pneg %p98
        $region38: #{tpu_custom_call.1} parent=27 // pred_check_branch
          %452 = sbr.rel (%p450) target = $region40
        $region39: #{tpu_custom_call.1} parent=27 // pred_region
          _
        $region40: #{tpu_custom_call.1} parent=27 // pred_fallthru
          _
        // Predicated region
        $region41: #{tpu_custom_call.1} parent=27 // pred_check
          %p453 = pneg %p124
        $region42: #{tpu_custom_call.1} parent=27 // pred_check_branch
          %455 = sbr.rel (%p453) target = $region44
        $region43: #{tpu_custom_call.1} parent=27 // pred_region
          %s457 = ssub.s32 32, 32
          %458 = vsyncadd %s441, %s457
          %s459 = smul.addr %s28, 32
          %s460 = scalar_lea.hbm %s3, %s459
          %s462 = sshll.u32 %s444, 4
          %s463 = int_to_ptr.vmem [resolvable:$true] %s462
          %465 = dma.vmem_to_hbm [thread:$0]  %s463, 32, %s460, %s441
        $region44: #{tpu_custom_call.1} parent=27 // pred_fallthru
          _
        // Predicated region
        $region45: #{tpu_custom_call.1} parent=27 // pred_check
          %p466 = pneg %p150
        $region46: #{tpu_custom_call.1} parent=27 // pred_check_branch
          %468 = sbr.rel (%p466) target = $region48
        $region47: #{tpu_custom_call.1} parent=27 // pred_region
          %s470 = ssub.s32 32, 32
          %471 = vsyncadd %s446, %s470
          %s472 = smul.addr %s28, 32
          %s473 = scalar_lea.hbm %s4, %s472
          %s475 = sshll.u32 %s449, 4
          %s476 = int_to_ptr.vmem [resolvable:$true] %s475
          %478 = dma.vmem_to_hbm [thread:$0]  %s476, 32, %s473, %s446
        $region48: #{tpu_custom_call.1} parent=27 // pred_fallthru
          _
      $region28: #{tpu_custom_call.1} parent=5 // pred_fallthru
        _
      %p479 = scmp.le.s32.totalorder 2, %s23
      // Predicated region
      $region49: #{tpu_custom_call.1} parent=5 // pred_check
        %p480 = pneg %p479
      $region50: #{tpu_custom_call.1} parent=5 // pred_check_branch
        %482 = sbr.rel (%p480) target = $region52
      $region51: #{tpu_custom_call.1} parent=5 // pred_region
        %s483 = ssub.s32 %s23, 2
        // Predicated region
        $region53: #{tpu_custom_call.1} parent=51 // pred_check
          %p484 = pneg %p104
        $region54: #{tpu_custom_call.1} parent=51 // pred_check_branch
          %486 = sbr.rel (%p484) target = $region56
        $region55: #{tpu_custom_call.1} parent=51 // pred_region
          %p487 = scmp.lt.s32.totalorder %s29, 1
          %s488 = scalar_select %p487, %s29, 1
          %s489 = scalar_lea.vmem %s2, %s488
        $region56: #{tpu_custom_call.1} parent=51 // pred_fallthru
          _
        // Predicated region
        $region57: #{tpu_custom_call.1} parent=51 // pred_check
          %p490 = pneg %p130
        $region58: #{tpu_custom_call.1} parent=51 // pred_check_branch
          %492 = sbr.rel (%p490) target = $region60
        $region59: #{tpu_custom_call.1} parent=51 // pred_region
          %s493 = sand.u32 %s115, 1
          %s494 = scalar_lea.sflag [#allocation4], %s493
          %s495 = sand.u32 %s115, 1
          %s496 = smul.addr %s495, 2
          %s497 = scalar_lea.vmem [#allocation7], %s496
          %498 = dma.done %s494, 32
        $region60: #{tpu_custom_call.1} parent=51 // pred_fallthru
          _
        // Predicated region
        $region61: #{tpu_custom_call.1} parent=51 // pred_check
          %p499 = pneg %p156
        $region62: #{tpu_custom_call.1} parent=51 // pred_check_branch
          %501 = sbr.rel (%p499) target = $region64
        $region63: #{tpu_custom_call.1} parent=51 // pred_region
          %s502 = sand.u32 %s141, 1
          %s503 = scalar_lea.sflag [#allocation9], %s502
          %s504 = sand.u32 %s141, 1
          %s505 = smul.addr %s504, 2
          %s506 = scalar_lea.vmem [#allocation8], %s505
          %507 = dma.done %s503, 32
        $region64: #{tpu_custom_call.1} parent=51 // pred_fallthru
          _
      $region52: #{tpu_custom_call.1} parent=5 // pred_fallthru
        _
    $region6: #{tpu_custom_call.1} parent=1 // loop_footer
      %s27 = sadd.s32 1, %s23
    $region7: #{tpu_custom_call.1} parent=1 // loop_footer_branch
      %22 = sbr.rel target = $region3
    $region8: #{tpu_custom_call.1} parent=1 // loop_exit
      _
    %508 = vsyncpa [#allocation3], 1
    %s509 = scalar_lea.sflag [#allocation3], 1
    %510 = vsyncpa %s509, 1
    %511 = vsyncpa [#allocation6], 1
    %s512 = scalar_lea.sflag [#allocation6], 1
    %513 = vsyncpa %s512, 1
    %514 = vsyncpa [#allocation4], 1
    %s515 = scalar_lea.sflag [#allocation4], 1
    %516 = vsyncpa %s515, 1
    %517 = vsyncpa [#allocation9], 1
    %s518 = scalar_lea.sflag [#allocation9], 1
    %519 = vsyncpa %s518, 1

</llo_original>
